<compile_context>
chip_gen: v7x
topology: tpu7x:2x2x1
jax: 0.10.0
libtpu: 0.0.40
codegen_flags: <defaults>
</compile_context>

<pallas_src>
import jax
import jax.numpy as jnp
import numpy as np
from jax.experimental import pallas as pl
from jax.experimental.pallas import tpu as pltpu  # noqa: F401  (TPU backend)


def _make_divisible(v, divisor, min_value=None):
    if min_value is None:
        min_value = divisor
    new_v = max(min_value, int(v + divisor / 2) // divisor * divisor)
    if new_v < 0.9 * v:
        new_v += divisor
    return new_v


# ----------------------------- configuration -------------------------------
BATCH = 2
INP = 32                      # `inp` of SELayer (sizes the bottleneck)
OUP = 32                      # `oup` of SELayer == channel count of x
H = 16
W = 16
REDUCTION = 4
HIDDEN = _make_divisible(INP // REDUCTION, 8)     # -> 8


# ------------------------------- helpers ------------------------------------
def _sigmoid(z):
    # exp -> EUP; approx reciprocal -> EUP (approx=False would take the VALU
    # divide/Newton path).  Keeps the short serial excite chain off the VALU.
    return pl.reciprocal(1.0 + jnp.exp(-z), approx=True)


def pack_se_params(w1, b1, w2, b2):
    """Pack fc1/fc2 weights + biases (PyTorch (out, in) layout) into one
    padded f32 buffer of shape (hidden + C, C + 1):
        rows [0:h),   cols [0:C)  : fc1.weight  (h, C)
        rows [0:h),   col  C      : fc1.bias    (h,)
        rows [h:h+C), cols [0:h)  : fc2.weight  (C, h)
        rows [h:h+C), col  C      : fc2.bias    (C,)
    Done once at parameter-load time -> a single DMA per kernel call."""
    h, c = w1.shape
    packed = jnp.zeros((h + c, c + 1), jnp.float32)
    packed = packed.at[0:h, 0:c].set(w1)
    packed = packed.at[0:h, c].set(b1)
    packed = packed.at[h:h + c, 0:h].set(w2)
    packed = packed.at[h:h + c, c].set(b2)
    return packed


# ------------------------------- wrapper ------------------------------------
@jax.jit
def se_layer(x, packed):
    """SELayer.forward.  x: (B, C, H, W), packed: packed parameter buffer."""
    B, C, Hh, Ww = x.shape
    HW = Hh * Ww
    hidden = packed.shape[0] - C
    x_flat = x.reshape(B, C, HW)     # lane-dense minor dim (HW = 256)

    def kernel(x_ref, p_ref, o_ref):
        # Static views into the single packed parameter buffer (one DMA).
        w1 = p_ref[0:hidden, 0:C]                    # (h, C)  fc1.weight
        b1c = p_ref[0:hidden, C:C + 1]               # (h, 1)  fc1.bias (column)
        w2 = p_ref[hidden:hidden + C, 0:hidden]      # (C, h)  fc2.weight
        b2c = p_ref[hidden:hidden + C, C:C + 1]      # (C, 1)  fc2.bias (column)

        for b in range(B):                           # static unroll (B = 2)
            xb = x_ref[b]                            # (C, HW)
            # squeeze: lane-axis mean, keepdims keeps C on sublanes
            pooled = jnp.mean(xb, axis=-1, keepdims=True)          # (C, 1)
            # excite: fc1 -> SiLU -> fc2 -> sigmoid (column-vector form)
            h1 = jnp.dot(w1, pooled,
                         preferred_element_type=jnp.float32) + b1c  # (h, 1)
            h1 = h1 * _sigmoid(h1)                                  # SiLU
            s = _sigmoid(jnp.dot(w2, h1,
                                 preferred_element_type=jnp.float32) + b2c)
            # scale: (C, 1) gate broadcasts across the HW lane axis
            o_ref[b] = (xb * s).astype(o_ref.dtype)

    def full_spec(shape):
        nd = len(shape)
        return pl.BlockSpec(shape, lambda *_: (0,) * nd)

    out = pl.pallas_call(
        kernel,
        out_shape=jax.ShapeDtypeStruct((B, C, HW), x.dtype),
        in_specs=[full_spec((B, C, HW)), full_spec(packed.shape)],
        out_specs=full_spec((B, C, HW)),
        input_output_aliases={0: 0},     # gated result may reuse x's buffer
    )(x_flat, packed)
    return out.reshape(B, C, Hh, Ww)


# --------------------------- pure-JAX reference ------------------------------
def ref_se_layer(x, w1, b1, w2, b2):
    y = x.mean(axis=(2, 3))                                  # (B, C)
    y = y @ w1.T + b1
    y = y * (1.0 / (1.0 + jnp.exp(-y)))                      # SiLU
    y = y @ w2.T + b2
    y = 1.0 / (1.0 + jnp.exp(-y))                            # Sigmoid
    return x * y[:, :, None, None]


# --------------------------------- main --------------------------------------
if __name__ == "__main__":
    key = jax.random.PRNGKey(0)
    kx, k1, k2, k3, k4 = jax.random.split(key, 5)

    x = jax.random.normal(kx, (BATCH, OUP, H, W), jnp.float32)

    # torch.nn.Linear default init: U(-1/sqrt(fan_in), 1/sqrt(fan_in)),
    # weights in PyTorch (out_features, in_features) layout.
    lim1 = 1.0 / np.sqrt(OUP)
    lim2 = 1.0 / np.sqrt(HIDDEN)
    w1 = jax.random.uniform(k1, (HIDDEN, OUP), jnp.float32, -lim1, lim1)  # fc1.weight
    b1 = jax.random.uniform(k2, (HIDDEN,), jnp.float32, -lim1, lim1)      # fc1.bias
    w2 = jax.random.uniform(k3, (OUP, HIDDEN), jnp.float32, -lim2, lim2)  # fc2.weight
    b2 = jax.random.uniform(k4, (OUP,), jnp.float32, -lim2, lim2)         # fc2.bias

    packed = pack_se_params(w1, b1, w2, b2)    # one-time host-side packing

    out = jax.block_until_ready(se_layer(x, packed))

    ref = ref_se_layer(x, w1, b1, w2, b2)
    assert out.shape == (BATCH, OUP, H, W)
    # approx=True reciprocal in the gate -> slightly looser tolerance.
    np.testing.assert_allclose(np.asarray(out), np.asarray(ref),
                               atol=5e-3, rtol=5e-3)
    print("KERNEL_OK")
</pallas_src>

<mosaic_0001>
module attributes {stable_mosaic.version = 11 : i64} {
  func.func @kernel(%arg0: memref<2x32x256xf32, #tpu.memory_space<vmem>>, %arg1: memref<40x33xf32, #tpu.memory_space<vmem>>, %arg2: memref<2x32x256xf32, #tpu.memory_space<vmem>>) attributes {dimension_semantics = [], scalar_prefetch = 0 : i64, scratch_operands = 0 : i64, tpu.core_type = #tpu.core_type<tc>} {
    %c0 = arith.constant 0 : index
    %c0_0 = arith.constant 0 : index
    %0 = vector.load %arg1[%c0, %c0_0] : memref<40x33xf32, #tpu.memory_space<vmem>>, vector<8x32xf32>
    %c0_1 = arith.constant 0 : index
    %c32 = arith.constant 32 : index
    %1 = vector.load %arg1[%c0_1, %c32] : memref<40x33xf32, #tpu.memory_space<vmem>>, vector<8x1xf32>
    %c8 = arith.constant 8 : index
    %c0_2 = arith.constant 0 : index
    %2 = vector.load %arg1[%c8, %c0_2] : memref<40x33xf32, #tpu.memory_space<vmem>>, vector<32x8xf32>
    %c8_3 = arith.constant 8 : index
    %c32_4 = arith.constant 32 : index
    %3 = vector.load %arg1[%c8_3, %c32_4] : memref<40x33xf32, #tpu.memory_space<vmem>>, vector<32x1xf32>
    %c0_5 = arith.constant 0 : index
    %c0_6 = arith.constant 0 : index
    %c0_7 = arith.constant 0 : index
    %4 = vector.load %arg0[%c0_5, %c0_6, %c0_7] : memref<2x32x256xf32, #tpu.memory_space<vmem>>, vector<1x32x256xf32>
    %5 = vector.shape_cast %4 : vector<1x32x256xf32> to vector<32x256xf32>
    %cst = arith.constant dense<0.000000e+00> : vector<32xf32>
    %6 = vector.multi_reduction <add>, %5, %cst [1] : vector<32x256xf32> to vector<32xf32>
    %7 = vector.shape_cast %6 : vector<32xf32> to vector<32x1xf32>
    %cst_8 = arith.constant 2.560000e+02 : f32
    %8 = vector.broadcast %cst_8 : f32 to vector<32x1xf32>
    %9 = arith.divf %7, %8 : vector<32x1xf32>
    %cst_9 = arith.constant dense<0.000000e+00> : vector<8x1xf32>
    %10 = tpu.matmul %0, %9, %cst_9 {dimension_numbers = #tpu.dot_dimension_numbers<[1], [0], [0], [1], [0, 0, 1, 1], [], []>} : vector<8x32xf32>, vector<32x1xf32>, vector<8x1xf32> -> vector<8x1xf32>
    %11 = arith.addf %10, %1 : vector<8x1xf32>
    %cst_10 = arith.constant 0.000000e+00 : f32
    %12 = vector.broadcast %cst_10 : f32 to vector<8x1xf32>
    %13 = arith.subf %12, %11 : vector<8x1xf32>
    %14 = math.exp %13 : vector<8x1xf32>
    %cst_11 = arith.constant 1.000000e+00 : f32
    %15 = vector.broadcast %cst_11 : f32 to vector<8x1xf32>
    %16 = arith.addf %15, %14 : vector<8x1xf32>
    %17 = tpu.reciprocal %16 {approx = true} : vector<8x1xf32> -> vector<8x1xf32>
    %18 = arith.mulf %11, %17 : vector<8x1xf32>
    %cst_12 = arith.constant dense<0.000000e+00> : vector<32x1xf32>
    %19 = tpu.matmul %2, %18, %cst_12 {dimension_numbers = #tpu.dot_dimension_numbers<[1], [0], [0], [1], [0, 0, 1, 1], [], []>} : vector<32x8xf32>, vector<8x1xf32>, vector<32x1xf32> -> vector<32x1xf32>
    %20 = arith.addf %19, %3 : vector<32x1xf32>
    %cst_13 = arith.constant 0.000000e+00 : f32
    %21 = vector.broadcast %cst_13 : f32 to vector<32x1xf32>
    %22 = arith.subf %21, %20 : vector<32x1xf32>
    %23 = math.exp %22 : vector<32x1xf32>
    %cst_14 = arith.constant 1.000000e+00 : f32
    %24 = vector.broadcast %cst_14 : f32 to vector<32x1xf32>
    %25 = arith.addf %24, %23 : vector<32x1xf32>
    %26 = tpu.reciprocal %25 {approx = true} : vector<32x1xf32> -> vector<32x1xf32>
    %27 = vector.broadcast %26 : vector<32x1xf32> to vector<32x256xf32>
    %28 = arith.mulf %5, %27 : vector<32x256xf32>
    %c0_15 = arith.constant 0 : index
    %c0_16 = arith.constant 0 : index
    %c0_17 = arith.constant 0 : index
    %29 = vector.load %arg2[%c0_15, %c0_16, %c0_17] : memref<2x32x256xf32, #tpu.memory_space<vmem>>, vector<1x32x256xf32>
    %30 = vector.shape_cast %29 : vector<1x32x256xf32> to vector<32x256xf32>
    %31 = vector.shape_cast %28 : vector<32x256xf32> to vector<1x32x256xf32>
    tpu.vector_store %arg2[%c0_15, %c0_16, %c0_17], %31 {strides = array<i32>} : memref<2x32x256xf32, #tpu.memory_space<vmem>>, vector<1x32x256xf32>,
    %c1 = arith.constant 1 : index
    %c0_18 = arith.constant 0 : index
    %c0_19 = arith.constant 0 : index
    %32 = vector.load %arg0[%c1, %c0_18, %c0_19] : memref<2x32x256xf32, #tpu.memory_space<vmem>>, vector<1x32x256xf32>
    %33 = vector.shape_cast %32 : vector<1x32x256xf32> to vector<32x256xf32>
    %cst_20 = arith.constant dense<0.000000e+00> : vector<32xf32>
    %34 = vector.multi_reduction <add>, %33, %cst_20 [1] : vector<32x256xf32> to vector<32xf32>
    %35 = vector.shape_cast %34 : vector<32xf32> to vector<32x1xf32>
    %cst_21 = arith.constant 2.560000e+02 : f32
    %36 = vector.broadcast %cst_21 : f32 to vector<32x1xf32>
    %37 = arith.divf %35, %36 : vector<32x1xf32>
    %cst_22 = arith.constant dense<0.000000e+00> : vector<8x1xf32>
    %38 = tpu.matmul %0, %37, %cst_22 {dimension_numbers = #tpu.dot_dimension_numbers<[1], [0], [0], [1], [0, 0, 1, 1], [], []>} : vector<8x32xf32>, vector<32x1xf32>, vector<8x1xf32> -> vector<8x1xf32>
    %39 = arith.addf %38, %1 : vector<8x1xf32>
    %cst_23 = arith.constant 0.000000e+00 : f32
    %40 = vector.broadcast %cst_23 : f32 to vector<8x1xf32>
    %41 = arith.subf %40, %39 : vector<8x1xf32>
    %42 = math.exp %41 : vector<8x1xf32>
    %cst_24 = arith.constant 1.000000e+00 : f32
    %43 = vector.broadcast %cst_24 : f32 to vector<8x1xf32>
    %44 = arith.addf %43, %42 : vector<8x1xf32>
    %45 = tpu.reciprocal %44 {approx = true} : vector<8x1xf32> -> vector<8x1xf32>
    %46 = arith.mulf %39, %45 : vector<8x1xf32>
    %cst_25 = arith.constant dense<0.000000e+00> : vector<32x1xf32>
    %47 = tpu.matmul %2, %46, %cst_25 {dimension_numbers = #tpu.dot_dimension_numbers<[1], [0], [0], [1], [0, 0, 1, 1], [], []>} : vector<32x8xf32>, vector<8x1xf32>, vector<32x1xf32> -> vector<32x1xf32>
    %48 = arith.addf %47, %3 : vector<32x1xf32>
    %cst_26 = arith.constant 0.000000e+00 : f32
    %49 = vector.broadcast %cst_26 : f32 to vector<32x1xf32>
    %50 = arith.subf %49, %48 : vector<32x1xf32>
    %51 = math.exp %50 : vector<32x1xf32>
    %cst_27 = arith.constant 1.000000e+00 : f32
    %52 = vector.broadcast %cst_27 : f32 to vector<32x1xf32>
    %53 = arith.addf %52, %51 : vector<32x1xf32>
    %54 = tpu.reciprocal %53 {approx = true} : vector<32x1xf32> -> vector<32x1xf32>
    %55 = vector.broadcast %54 : vector<32x1xf32> to vector<32x256xf32>
    %56 = arith.mulf %33, %55 : vector<32x256xf32>
    %c1_28 = arith.constant 1 : index
    %c0_29 = arith.constant 0 : index
    %c0_30 = arith.constant 0 : index
    %57 = vector.load %arg2[%c1_28, %c0_29, %c0_30] : memref<2x32x256xf32, #tpu.memory_space<vmem>>, vector<1x32x256xf32>
    %58 = vector.shape_cast %57 : vector<1x32x256xf32> to vector<32x256xf32>
    %59 = vector.shape_cast %56 : vector<32x256xf32> to vector<1x32x256xf32>
    tpu.vector_store %arg2[%c1_28, %c0_29, %c0_30], %59 {strides = array<i32>} : memref<2x32x256xf32, #tpu.memory_space<vmem>>, vector<1x32x256xf32>,
    return
  }
}

</mosaic_0001>

<llo_original>
// kernel: se_layer.1
$region0: #{se_layer.1}
  #allocation0 [shape = 'u32[]', space=smem, size = 0x4, offset = 0x4, fixed_abs, tag = 'smem constant byte address 0x4 - core index']
  #allocation1 [shape = 'u32[144,128]{1,0:T(1,128)}', space=vmem, size = 0x12000, scoped, tag = 'internal scratch']
  %s0 = inlined_call_operand.vmem [shape: f32[2,32,256], index: 0, kind: input, shape index: {}, may-alias: {0,2}]
  %s1 = inlined_call_operand.vmem [shape: f32[40,33], index: 1, kind: input, shape index: {}]
  %s2 = inlined_call_operand.vmem [shape: f32[2,32,256], index: 2, kind: output, shape index: {}, may-alias: {0,2}]
  %s3 = sld [smem:[#allocation0]]
  $region18: #{se_layer.1} parent=0
    _
  %s5 = ssub.s32 1, %s3
  %s6 = scalar_select 0, %s5, %s3
  // Predicated region
  $region2: #{se_layer.1} parent=0 // pred_check
    _
  $region3: #{se_layer.1} parent=0 // pred_check_branch
    %8 = sbr.rel (0) target = $region5
  $region4: #{se_layer.1} parent=0 // pred_region
    _
  $region5: #{se_layer.1} parent=0 // pred_fallthru
    _
  // Predicated region
  $region6: #{se_layer.1} parent=0 // pred_check
    _
  $region7: #{se_layer.1} parent=0 // pred_check_branch
    %10 = sbr.rel (0) target = $region9
  $region8: #{se_layer.1} parent=0 // pred_region
    _
  $region9: #{se_layer.1} parent=0 // pred_fallthru
    _
  %v11 = vld [vmem:[%s1] sm:$0xff]
  %v12 = vld [vmem:[%s1 + $0x8] sm:$0xff]
  %v13 = vld [vmem:[%s1 + $0x10] sm:$0xff]
  %v14 = vld [vmem:[%s1 + $0x18] sm:$0xff]
  %v15 = vld [vmem:[%s1 + $0x20] sm:$0xff]
  %v16 = vld [vmem:[%s0] sm:$0xff]
  %v17 = vld [vmem:[%s0 + $0x8] sm:$0xff]
  %v18 = vld [vmem:[%s0 + $0x10] sm:$0xff]
  %v19 = vld [vmem:[%s0 + $0x18] sm:$0xff]
  %v20 = vld [vmem:[%s0 + $0x20] sm:$0xff]
  %v21 = vld [vmem:[%s0 + $0x28] sm:$0xff]
  %v22 = vld [vmem:[%s0 + $0x30] sm:$0xff]
  %v23 = vld [vmem:[%s0 + $0x38] sm:$0xff]
  %v24 = vadd.f32 %v16, %v17
  %25 = vadd.xlane.f32.xlu0 %v24
  %v26 = vpop.xlane.xlu0 %25
  %v27 = vadd.f32 %v18, %v19
  %28 = vadd.xlane.f32.xlu0 %v27
  %v29 = vpop.xlane.xlu0 %28
  %v30 = vadd.f32 %v20, %v21
  %31 = vadd.xlane.f32.xlu0 %v30
  %v32 = vpop.xlane.xlu0 %31
  %v33 = vadd.f32 %v22, %v23
  %34 = vadd.xlane.f32.xlu0 %v33
  %v35 = vpop.xlane.xlu0 %34
  %v36 = vrcp.pop 256.0
  %v37 = vmul.f32 %v26, %v36
  %v38 = vmul.f32 %v29, %v36
  %v39 = vmul.f32 %v32, %v36
  %v40 = vmul.f32 %v35, %v36
  %42 = vrot.lane.b32.xlu0 %v11, 96
  %v43 = vpop.permute.xlu0 %42
  %vm45 = vcmask 261120
  %v46 = vsel %vm45, %v11, 0
  %48 = vmatprep.subr.mxu0 0.0
  %49 = vmatpush1.msra.mxu0 %v37
  %50 = vmatprep.subr.mxu0 0.0
  %51 = vmatpush1.msra.mxu0 %v38
  %52 = vmatprep.subr.mxu0 0.0
  %53 = vmatpush1.msra.mxu0 %v39
  %54 = vmatprep.subr.mxu0 0.0
  %55 = vmatpush1.msra.mxu0 %v40
  %56 = vmatprep.subr.mxu0 0.0
  %57 = vmatpush1.msra.mxu0 0.0
  %58 = vmatprep.subr.mxu0 0.0
  %59 = vmatpush1.msra.mxu0 0.0
  %60 = vmatprep.subr.mxu0 0.0
  %61 = vmatpush1.msra.mxu0 0.0
  %62 = vmatprep.subr.mxu0 0.0
  %63 = vmatpush1.msra.mxu0 0.0
  %64 = vmatprep.subr.mxu0 0.0
  %65 = vmatpush1.msra.mxu0 0.0
  %66 = vmatprep.subr.mxu0 0.0
  %67 = vmatpush1.msra.mxu0 0.0
  %68 = vmatprep.subr.mxu0 0.0
  %69 = vmatpush1.msra.mxu0 0.0
  %70 = vmatprep.subr.mxu0 0.0
  %71 = vmatpush1.msra.mxu0 0.0
  %72 = vmatprep.subr.mxu0 0.0
  %73 = vmatpush1.msra.mxu0 0.0
  %74 = vmatprep.subr.mxu0 0.0
  %75 = vmatpush1.msra.mxu0 0.0
  %76 = vmatprep.subr.mxu0 0.0
  %77 = vmatpush1.msra.mxu0 0.0
  %78 = vmatprep.subr.mxu0 0.0
  %79 = vmatpush1.msra.mxu0 0.0
  %80 = vmatprep.subr.mxu0 0.0
  %81 = vmatpush1.msra.mxu0 0.0
  %82 = vmatprep.subr.mxu0 0.0
  %83 = vmatpush1.msra.mxu0 0.0
  %84 = vmatprep.subr.mxu0 0.0
  %85 = vmatpush1.msra.mxu0 0.0
  %86 = vmatprep.subr.mxu0 0.0
  %87 = vmatpush1.msra.mxu0 0.0
  %88 = vmatprep.subr.mxu0 0.0
  %89 = vmatpush1.msra.mxu0 0.0
  %90 = vmatprep.subr.mxu0 0.0
  %91 = vmatpush1.msra.mxu0 0.0
  %92 = vmatprep.subr.mxu0 0.0
  %93 = vmatpush1.msra.mxu0 0.0
  %94 = vmatprep.subr.mxu0 0.0
  %95 = vmatpush1.msra.mxu0 0.0
  %96 = vmatprep.subr.mxu0 0.0
  %97 = vmatpush1.msra.mxu0 0.0
  %98 = vmatprep.subr.mxu0 0.0
  %99 = vmatpush1.msra.mxu0 0.0
  %100 = vmatprep.subr.mxu0 0.0
  %101 = vmatpush1.msra.mxu0 0.0
  %102 = vmatprep.subr.mxu0 0.0
  %103 = vmatpush1.msra.mxu0 0.0
  %104 = vmatprep.subr.mxu0 0.0
  %105 = vmatpush1.msra.mxu0 0.0
  %106 = vmatprep.subr.mxu0 0.0
  %107 = vmatpush1.msra.mxu0 0.0
  %108 = vmatprep.subr.mxu0 0.0
  %109 = vmatpush1.msra.mxu0 0.0
  %110 = vmatprep.subr.mxu0 0.0
  %111 = vmatpush1.msra.mxu0 0.0
  %112 = vmatprep.mubr.f32.mxu0 0.0
  %113 = vmatmul.mubr.f32.gmra.mrb[0].mxu0 %v46
  %v114 = vpop.f32.mrb[0].mxu0
  %v115 = vadd.f32 %v43, %v114
  %v116 = vpop.f32.mrb[0].mxu0
  %117 = vdwg.mxu0
  %v118 = vsub.f32 0.0, %v115
  %v119 = vmul.f32 %v118, 1.442695
  %v120 = vpow.pop %v119
  %v121 = vadd.f32 %v120, 1.0
  %v122 = vrcp.pop %v121
  %v123 = vmul.f32 %v115, %v122
  %128 = vrot.lane.b32.xlu0 %v12, 96
  %v129 = vpop.permute.xlu0 %128
  %130 = vrot.lane.b32.xlu0 %v13, 96
  %v131 = vpop.permute.xlu0 %130
  %132 = vrot.lane.b32.xlu0 %v14, 96
  %v133 = vpop.permute.xlu0 %132
  %134 = vrot.lane.b32.xlu0 %v15, 96
  %v135 = vpop.permute.xlu0 %134
  %vm140 = vcmask 64512
  %v141 = vsel %vm140, %v12, 0
  %v143 = vsel %vm140, %v13, 0
  %v145 = vsel %vm140, %v14, 0
  %v147 = vsel %vm140, %v15, 0
  %149 = vmatprep.subr.mxu0 0.0
  %150 = vmatpush1.msra.mxu0 %v123
  %151 = vmatprep.subr.mxu0 0.0
  %152 = vmatpush1.msra.mxu0 0.0
  %153 = vmatprep.subr.mxu0 0.0
  %154 = vmatpush1.msra.mxu0 0.0
  %155 = vmatprep.subr.mxu0 0.0
  %156 = vmatpush1.msra.mxu0 0.0
  %157 = vmatprep.subr.mxu0 0.0
  %158 = vmatpush1.msra.mxu0 0.0
  %159 = vmatprep.subr.mxu0 0.0
  %160 = vmatpush1.msra.mxu0 0.0
  %161 = vmatprep.subr.mxu0 0.0
  %162 = vmatpush1.msra.mxu0 0.0
  %163 = vmatprep.subr.mxu0 0.0
  %164 = vmatpush1.msra.mxu0 0.0
  %165 = vmatprep.subr.mxu0 0.0
  %166 = vmatpush1.msra.mxu0 0.0
  %167 = vmatprep.subr.mxu0 0.0
  %168 = vmatpush1.msra.mxu0 0.0
  %169 = vmatprep.subr.mxu0 0.0
  %170 = vmatpush1.msra.mxu0 0.0
  %171 = vmatprep.subr.mxu0 0.0
  %172 = vmatpush1.msra.mxu0 0.0
  %173 = vmatprep.subr.mxu0 0.0
  %174 = vmatpush1.msra.mxu0 0.0
  %175 = vmatprep.subr.mxu0 0.0
  %176 = vmatpush1.msra.mxu0 0.0
  %177 = vmatprep.subr.mxu0 0.0
  %178 = vmatpush1.msra.mxu0 0.0
  %179 = vmatprep.subr.mxu0 0.0
  %180 = vmatpush1.msra.mxu0 0.0
  %181 = vmatprep.subr.mxu0 0.0
  %182 = vmatpush1.msra.mxu0 0.0
  %183 = vmatprep.subr.mxu0 0.0
  %184 = vmatpush1.msra.mxu0 0.0
  %185 = vmatprep.subr.mxu0 0.0
  %186 = vmatpush1.msra.mxu0 0.0
  %187 = vmatprep.subr.mxu0 0.0
  %188 = vmatpush1.msra.mxu0 0.0
  %189 = vmatprep.subr.mxu0 0.0
  %190 = vmatpush1.msra.mxu0 0.0
  %191 = vmatprep.subr.mxu0 0.0
  %192 = vmatpush1.msra.mxu0 0.0
  %193 = vmatprep.subr.mxu0 0.0
  %194 = vmatpush1.msra.mxu0 0.0
  %195 = vmatprep.subr.mxu0 0.0
  %196 = vmatpush1.msra.mxu0 0.0
  %197 = vmatprep.subr.mxu0 0.0
  %198 = vmatpush1.msra.mxu0 0.0
  %199 = vmatprep.subr.mxu0 0.0
  %200 = vmatpush1.msra.mxu0 0.0
  %201 = vmatprep.subr.mxu0 0.0
  %202 = vmatpush1.msra.mxu0 0.0
  %203 = vmatprep.subr.mxu0 0.0
  %204 = vmatpush1.msra.mxu0 0.0
  %205 = vmatprep.subr.mxu0 0.0
  %206 = vmatpush1.msra.mxu0 0.0
  %207 = vmatprep.subr.mxu0 0.0
  %208 = vmatpush1.msra.mxu0 0.0
  %209 = vmatprep.subr.mxu0 0.0
  %210 = vmatpush1.msra.mxu0 0.0
  %211 = vmatprep.subr.mxu0 0.0
  %212 = vmatpush1.msra.mxu0 0.0
  %213 = vmatprep.mubr.f32.mxu0 0.0
  %214 = vmatmul.mubr.f32.gmra.mrb[0].mxu0 %v141
  %v215 = vpop.f32.mrb[0].mxu0
  %v216 = vadd.f32 %v129, %v215
  %v217 = vpop.f32.mrb[0].mxu0
  %218 = vmatprep.mubr.f32.mxu0 0.0
  %219 = vmatmul.mubr.f32.gmra.mrb[0].mxu0 %v143
  %v220 = vpop.f32.mrb[0].mxu0
  %v221 = vadd.f32 %v131, %v220
  %v222 = vpop.f32.mrb[0].mxu0
  %223 = vmatprep.mubr.f32.mxu0 0.0
  %224 = vmatmul.mubr.f32.gmra.mrb[0].mxu0 %v145
  %v225 = vpop.f32.mrb[0].mxu0
  %v226 = vadd.f32 %v133, %v225
  %v227 = vpop.f32.mrb[0].mxu0
  %228 = vmatprep.mubr.f32.mxu0 0.0
  %229 = vmatmul.mubr.f32.gmra.mrb[0].mxu0 %v147
  %v230 = vpop.f32.mrb[0].mxu0
  %v231 = vadd.f32 %v135, %v230
  %v232 = vpop.f32.mrb[0].mxu0
  %233 = vdwg.mxu0
  %v234 = vsub.f32 0.0, %v216
  %v235 = vsub.f32 0.0, %v221
  %v236 = vsub.f32 0.0, %v226
  %v237 = vsub.f32 0.0, %v231
  %v238 = vmul.f32 %v234, 1.442695
  %v239 = vpow.pop %v238
  %v240 = vmul.f32 %v235, 1.442695
  %v241 = vpow.pop %v240
  %v242 = vmul.f32 %v236, 1.442695
  %v243 = vpow.pop %v242
  %v244 = vmul.f32 %v237, 1.442695
  %v245 = vpow.pop %v244
  %v246 = vadd.f32 %v239, 1.0
  %v247 = vadd.f32 %v241, 1.0
  %v248 = vadd.f32 %v243, 1.0
  %v249 = vadd.f32 %v245, 1.0
  %v250 = vrcp.pop %v246
  %v251 = vrcp.pop %v247
  %v252 = vrcp.pop %v248
  %v253 = vrcp.pop %v249
  %255 = vset.pattern.permute.xlu0 0
  %256 = vperm.xlu0 %255, %v250
  %v257 = vpop.permute.xlu0 %256
  %260 = vset.pattern.permute.xlu0 0
  %261 = vperm.xlu0 %260, %v251
  %v262 = vpop.permute.xlu0 %261
  %265 = vset.pattern.permute.xlu0 0
  %266 = vperm.xlu0 %265, %v252
  %v267 = vpop.permute.xlu0 %266
  %270 = vset.pattern.permute.xlu0 0
  %271 = vperm.xlu0 %270, %v253
  %v272 = vpop.permute.xlu0 %271
  %v274 = vmul.f32 %v16, %v257
  %v275 = vmul.f32 %v17, %v257
  %v276 = vmul.f32 %v18, %v262
  %v277 = vmul.f32 %v19, %v262
  %v278 = vmul.f32 %v20, %v267
  %v279 = vmul.f32 %v21, %v267
  %v280 = vmul.f32 %v22, %v272
  %v281 = vmul.f32 %v23, %v272
  %282 = vst [vmem:[%s2] sm:$0xff] %v274
  %283 = vst [vmem:[%s2 + $0x8] sm:$0xff] %v275
  %284 = vst [vmem:[%s2 + $0x10] sm:$0xff] %v276
  %285 = vst [vmem:[%s2 + $0x18] sm:$0xff] %v277
  %286 = vst [vmem:[%s2 + $0x20] sm:$0xff] %v278
  %287 = vst [vmem:[%s2 + $0x28] sm:$0xff] %v279
  %288 = vst [vmem:[%s2 + $0x30] sm:$0xff] %v280
  %289 = vst [vmem:[%s2 + $0x38] sm:$0xff] %v281
  %s290 = scalar_lea.vmem %s0, 64
  %v291 = vld [vmem:[%s290] sm:$0xff]
  %v292 = vld [vmem:[%s290 + $0x8] sm:$0xff]
  %v293 = vld [vmem:[%s290 + $0x10] sm:$0xff]
  %v294 = vld [vmem:[%s290 + $0x18] sm:$0xff]
  %v295 = vld [vmem:[%s290 + $0x20] sm:$0xff]
  %v296 = vld [vmem:[%s290 + $0x28] sm:$0xff]
  %v297 = vld [vmem:[%s290 + $0x30] sm:$0xff]
  %v298 = vld [vmem:[%s290 + $0x38] sm:$0xff]
  %v299 = vadd.f32 %v291, %v292
  %300 = vadd.xlane.f32.xlu0 %v299
  %v301 = vpop.xlane.xlu0 %300
  %v302 = vadd.f32 %v293, %v294
  %303 = vadd.xlane.f32.xlu0 %v302
  %v304 = vpop.xlane.xlu0 %303
  %v305 = vadd.f32 %v295, %v296
  %306 = vadd.xlane.f32.xlu0 %v305
  %v307 = vpop.xlane.xlu0 %306
  %v308 = vadd.f32 %v297, %v298
  %309 = vadd.xlane.f32.xlu0 %v308
  %v310 = vpop.xlane.xlu0 %309
  %v311 = vmul.f32 %v301, %v36
  %v312 = vmul.f32 %v304, %v36
  %v313 = vmul.f32 %v307, %v36
  %v314 = vmul.f32 %v310, %v36
  %315 = vmatprep.subr.mxu0 0.0
  %316 = vmatpush1.msra.mxu0 %v311
  %317 = vmatprep.subr.mxu0 0.0
  %318 = vmatpush1.msra.mxu0 %v312
  %319 = vmatprep.subr.mxu0 0.0
  %320 = vmatpush1.msra.mxu0 %v313
  %321 = vmatprep.subr.mxu0 0.0
  %322 = vmatpush1.msra.mxu0 %v314
  %323 = vmatprep.subr.mxu0 0.0
  %324 = vmatpush1.msra.mxu0 0.0
  %325 = vmatprep.subr.mxu0 0.0
  %326 = vmatpush1.msra.mxu0 0.0
  %327 = vmatprep.subr.mxu0 0.0
  %328 = vmatpush1.msra.mxu0 0.0
  %329 = vmatprep.subr.mxu0 0.0
  %330 = vmatpush1.msra.mxu0 0.0
  %331 = vmatprep.subr.mxu0 0.0
  %332 = vmatpush1.msra.mxu0 0.0
  %333 = vmatprep.subr.mxu0 0.0
  %334 = vmatpush1.msra.mxu0 0.0
  %335 = vmatprep.subr.mxu0 0.0
  %336 = vmatpush1.msra.mxu0 0.0
  %337 = vmatprep.subr.mxu0 0.0
  %338 = vmatpush1.msra.mxu0 0.0
  %339 = vmatprep.subr.mxu0 0.0
  %340 = vmatpush1.msra.mxu0 0.0
  %341 = vmatprep.subr.mxu0 0.0
  %342 = vmatpush1.msra.mxu0 0.0
  %343 = vmatprep.subr.mxu0 0.0
  %344 = vmatpush1.msra.mxu0 0.0
  %345 = vmatprep.subr.mxu0 0.0
  %346 = vmatpush1.msra.mxu0 0.0
  %347 = vmatprep.subr.mxu0 0.0
  %348 = vmatpush1.msra.mxu0 0.0
  %349 = vmatprep.subr.mxu0 0.0
  %350 = vmatpush1.msra.mxu0 0.0
  %351 = vmatprep.subr.mxu0 0.0
  %352 = vmatpush1.msra.mxu0 0.0
  %353 = vmatprep.subr.mxu0 0.0
  %354 = vmatpush1.msra.mxu0 0.0
  %355 = vmatprep.subr.mxu0 0.0
  %356 = vmatpush1.msra.mxu0 0.0
  %357 = vmatprep.subr.mxu0 0.0
  %358 = vmatpush1.msra.mxu0 0.0
  %359 = vmatprep.subr.mxu0 0.0
  %360 = vmatpush1.msra.mxu0 0.0
  %361 = vmatprep.subr.mxu0 0.0
  %362 = vmatpush1.msra.mxu0 0.0
  %363 = vmatprep.subr.mxu0 0.0
  %364 = vmatpush1.msra.mxu0 0.0
  %365 = vmatprep.subr.mxu0 0.0
  %366 = vmatpush1.msra.mxu0 0.0
  %367 = vmatprep.subr.mxu0 0.0
  %368 = vmatpush1.msra.mxu0 0.0
  %369 = vmatprep.subr.mxu0 0.0
  %370 = vmatpush1.msra.mxu0 0.0
  %371 = vmatprep.subr.mxu0 0.0
  %372 = vmatpush1.msra.mxu0 0.0
  %373 = vmatprep.subr.mxu0 0.0
  %374 = vmatpush1.msra.mxu0 0.0
  %375 = vmatprep.subr.mxu0 0.0
  %376 = vmatpush1.msra.mxu0 0.0
  %377 = vmatprep.subr.mxu0 0.0
  %378 = vmatpush1.msra.mxu0 0.0
  %379 = vmatprep.mubr.f32.mxu0 0.0
  %380 = vmatmul.mubr.f32.gmra.mrb[0].mxu0 %v46
  %v381 = vpop.f32.mrb[0].mxu0
  %v382 = vadd.f32 %v43, %v381
  %v383 = vpop.f32.mrb[0].mxu0
  %384 = vdwg.mxu0
  %v385 = vsub.f32 0.0, %v382
  %v386 = vmul.f32 %v385, 1.442695
  %v387 = vpow.pop %v386
  %v388 = vadd.f32 %v387, 1.0
  %v389 = vrcp.pop %v388
  %v390 = vmul.f32 %v382, %v389
  %391 = vmatprep.subr.mxu0 0.0
  %392 = vmatpush1.msra.mxu0 %v390
  %393 = vmatprep.subr.mxu0 0.0
  %394 = vmatpush1.msra.mxu0 0.0
  %395 = vmatprep.subr.mxu0 0.0
  %396 = vmatpush1.msra.mxu0 0.0
  %397 = vmatprep.subr.mxu0 0.0
  %398 = vmatpush1.msra.mxu0 0.0
  %399 = vmatprep.subr.mxu0 0.0
  %400 = vmatpush1.msra.mxu0 0.0
  %401 = vmatprep.subr.mxu0 0.0
  %402 = vmatpush1.msra.mxu0 0.0
  %403 = vmatprep.subr.mxu0 0.0
  %404 = vmatpush1.msra.mxu0 0.0
  %405 = vmatprep.subr.mxu0 0.0
  %406 = vmatpush1.msra.mxu0 0.0
  %407 = vmatprep.subr.mxu0 0.0
  %408 = vmatpush1.msra.mxu0 0.0
  %409 = vmatprep.subr.mxu0 0.0
  %410 = vmatpush1.msra.mxu0 0.0
  %411 = vmatprep.subr.mxu0 0.0
  %412 = vmatpush1.msra.mxu0 0.0
  %413 = vmatprep.subr.mxu0 0.0
  %414 = vmatpush1.msra.mxu0 0.0
  %415 = vmatprep.subr.mxu0 0.0
  %416 = vmatpush1.msra.mxu0 0.0
  %417 = vmatprep.subr.mxu0 0.0
  %418 = vmatpush1.msra.mxu0 0.0
  %419 = vmatprep.subr.mxu0 0.0
  %420 = vmatpush1.msra.mxu0 0.0
  %421 = vmatprep.subr.mxu0 0.0
  %422 = vmatpush1.msra.mxu0 0.0
  %423 = vmatprep.subr.mxu0 0.0
  %424 = vmatpush1.msra.mxu0 0.0
  %425 = vmatprep.subr.mxu0 0.0
  %426 = vmatpush1.msra.mxu0 0.0
  %427 = vmatprep.subr.mxu0 0.0
  %428 = vmatpush1.msra.mxu0 0.0
  %429 = vmatprep.subr.mxu0 0.0
  %430 = vmatpush1.msra.mxu0 0.0
  %431 = vmatprep.subr.mxu0 0.0
  %432 = vmatpush1.msra.mxu0 0.0
  %433 = vmatprep.subr.mxu0 0.0
  %434 = vmatpush1.msra.mxu0 0.0
  %435 = vmatprep.subr.mxu0 0.0
  %436 = vmatpush1.msra.mxu0 0.0
  %437 = vmatprep.subr.mxu0 0.0
  %438 = vmatpush1.msra.mxu0 0.0
  %439 = vmatprep.subr.mxu0 0.0
  %440 = vmatpush1.msra.mxu0 0.0
  %441 = vmatprep.subr.mxu0 0.0
  %442 = vmatpush1.msra.mxu0 0.0
  %443 = vmatprep.subr.mxu0 0.0
  %444 = vmatpush1.msra.mxu0 0.0
  %445 = vmatprep.subr.mxu0 0.0
  %446 = vmatpush1.msra.mxu0 0.0
  %447 = vmatprep.subr.mxu0 0.0
  %448 = vmatpush1.msra.mxu0 0.0
  %449 = vmatprep.subr.mxu0 0.0
  %450 = vmatpush1.msra.mxu0 0.0
  %451 = vmatprep.subr.mxu0 0.0
  %452 = vmatpush1.msra.mxu0 0.0
  %453 = vmatprep.subr.mxu0 0.0
  %454 = vmatpush1.msra.mxu0 0.0
  %455 = vmatprep.mubr.f32.mxu0 0.0
  %456 = vmatmul.mubr.f32.gmra.mrb[0].mxu0 %v141
  %v457 = vpop.f32.mrb[0].mxu0
  %v458 = vadd.f32 %v129, %v457
  %v459 = vpop.f32.mrb[0].mxu0
  %460 = vmatprep.mubr.f32.mxu0 0.0
  %461 = vmatmul.mubr.f32.gmra.mrb[0].mxu0 %v143
  %v462 = vpop.f32.mrb[0].mxu0
  %v463 = vadd.f32 %v131, %v462
  %v464 = vpop.f32.mrb[0].mxu0
  %465 = vmatprep.mubr.f32.mxu0 0.0
  %466 = vmatmul.mubr.f32.gmra.mrb[0].mxu0 %v145
  %v467 = vpop.f32.mrb[0].mxu0
  %v468 = vadd.f32 %v133, %v467
  %v469 = vpop.f32.mrb[0].mxu0
  %470 = vmatprep.mubr.f32.mxu0 0.0
  %471 = vmatmul.mubr.f32.gmra.mrb[0].mxu0 %v147
  %v472 = vpop.f32.mrb[0].mxu0
  %v473 = vadd.f32 %v135, %v472
  %v474 = vpop.f32.mrb[0].mxu0
  %475 = vdwg.mxu0
  %v476 = vsub.f32 0.0, %v458
  %v477 = vsub.f32 0.0, %v463
  %v478 = vsub.f32 0.0, %v468
  %v479 = vsub.f32 0.0, %v473
  %v480 = vmul.f32 %v476, 1.442695
  %v481 = vpow.pop %v480
  %v482 = vmul.f32 %v477, 1.442695
  %v483 = vpow.pop %v482
  %v484 = vmul.f32 %v478, 1.442695
  %v485 = vpow.pop %v484
  %v486 = vmul.f32 %v479, 1.442695
  %v487 = vpow.pop %v486
  %v488 = vadd.f32 %v481, 1.0
  %v489 = vadd.f32 %v483, 1.0
  %v490 = vadd.f32 %v485, 1.0
  %v491 = vadd.f32 %v487, 1.0
  %v492 = vrcp.pop %v488
  %v493 = vrcp.pop %v489
  %v494 = vrcp.pop %v490
  %v495 = vrcp.pop %v491
  %497 = vset.pattern.permute.xlu0 0
  %498 = vperm.xlu0 %497, %v492
  %v499 = vpop.permute.xlu0 %498
  %502 = vset.pattern.permute.xlu0 0
  %503 = vperm.xlu0 %502, %v493
  %v504 = vpop.permute.xlu0 %503
  %507 = vset.pattern.permute.xlu0 0
  %508 = vperm.xlu0 %507, %v494
  %v509 = vpop.permute.xlu0 %508
  %512 = vset.pattern.permute.xlu0 0
  %513 = vperm.xlu0 %512, %v495
  %v514 = vpop.permute.xlu0 %513
  %v516 = vmul.f32 %v291, %v499
  %v517 = vmul.f32 %v292, %v499
  %v518 = vmul.f32 %v293, %v504
  %v519 = vmul.f32 %v294, %v504
  %v520 = vmul.f32 %v295, %v509
  %v521 = vmul.f32 %v296, %v509
  %v522 = vmul.f32 %v297, %v514
  %v523 = vmul.f32 %v298, %v514
  %s524 = scalar_lea.vmem %s2, 64
  %525 = vst [vmem:[%s524] sm:$0xff] %v516
  %526 = vst [vmem:[%s524 + $0x8] sm:$0xff] %v517
  %527 = vst [vmem:[%s524 + $0x10] sm:$0xff] %v518
  %528 = vst [vmem:[%s524 + $0x18] sm:$0xff] %v519
  %529 = vst [vmem:[%s524 + $0x20] sm:$0xff] %v520
  %530 = vst [vmem:[%s524 + $0x28] sm:$0xff] %v521
  %531 = vst [vmem:[%s524 + $0x30] sm:$0xff] %v522
  %532 = vst [vmem:[%s524 + $0x38] sm:$0xff] %v523
  // Predicated region
  $region10: #{se_layer.1} parent=0 // pred_check
    _
  $region11: #{se_layer.1} parent=0 // pred_check_branch
    %534 = sbr.rel (0) target = $region13
  $region12: #{se_layer.1} parent=0 // pred_region
    _
  $region13: #{se_layer.1} parent=0 // pred_fallthru
    _
  // Predicated region
  $region14: #{se_layer.1} parent=0 // pred_check
    _
  $region15: #{se_layer.1} parent=0 // pred_check_branch
    %536 = sbr.rel (0) target = $region17
  $region16: #{se_layer.1} parent=0 // pred_region
    _
  $region17: #{se_layer.1} parent=0 // pred_fallthru
    _

</llo_original>
